<compile_context>
chip_gen: v6e
topology: v6e:2x2x1
jax: 0.10.0
libtpu: 0.0.40
codegen_flags: <defaults>
</compile_context>

<pallas_src>
import functools

import jax
import jax.numpy as jnp
from jax.experimental import pallas as pl
from jax.experimental.pallas import tpu as pltpu

IN_FEATURES = 96
HIDDEN = 32
OUT_FEATURES = 2


def _round_up(x: int, m: int) -> int:
    return ((x + m - 1) // m) * m


def _ensemble_kernel(s_ref, k_ref, w1s_ref, w1k_ref, b1_ref, dw_ref, db_ref, o_ref):
    # s_ref: (TB, s_dim) bf16   k_ref: (TB, k_dim) bf16
    # w1s_ref: (s_dim, 32) bf16 w1k_ref: (k_dim, 32) bf16  b1_ref: (1, 32) f32
    # dw_ref: (32, 1) f32       db_ref: (1, 1) f32          o_ref: (TB, 2) f32

    # Linear(96, 32) with the concat fused as a split matmul (MXU, f32 accumulate).
    h = jnp.dot(s_ref[...], w1s_ref[...], preferred_element_type=jnp.float32)
    h = h + jnp.dot(k_ref[...], w1k_ref[...], preferred_element_type=jnp.float32)
    h = jnp.maximum(h + b1_ref[...], 0.0)                       # ReLU, f32 epilogue

    # Linear(32, 2) + softmax over 2 classes == sigmoid of the logit difference.
    d = jnp.dot(h, dw_ref[...], preferred_element_type=jnp.float32) + db_ref[...]
    p1 = 1.0 / (1.0 + jnp.exp(-d))                              # (TB, 1) prob of class 1
    p0 = 1.0 - p1                                               # (TB, 1) prob of class 0

    col = jax.lax.broadcasted_iota(jnp.int32, o_ref.shape, 1)   # (TB, 2): 0,1 per column
    o_ref[...] = jnp.where(col == 1, p1, p0).astype(o_ref.dtype)


@functools.partial(jax.jit, static_argnames=("block_batch",))
def b_ensemble_forward(s_input, k_input, w1, b1, w2, b2, *, block_batch=2048):
    """Fused forward pass.  Weights are stored (in_features, out_features)."""
    batch, s_dim = s_input.shape
    k_dim = k_input.shape[1]
    assert s_dim + k_dim == IN_FEATURES, "s_dim + k_dim must equal 96"

    compute_dtype = jnp.bfloat16

    # One-time parameter prep (tiny arrays, done by XLA outside the kernel).
    w1_s = w1[:s_dim].astype(compute_dtype)                     # (s_dim, 32)
    w1_k = w1[s_dim:].astype(compute_dtype)                     # (k_dim, 32)
    b1_r = b1.reshape(1, HIDDEN).astype(jnp.float32)            # (1, 32)
    dw = (w2[:, 1] - w2[:, 0]).reshape(HIDDEN, 1).astype(jnp.float32)   # (32, 1)
    db = (b2.reshape(-1)[1] - b2.reshape(-1)[0]).reshape(1, 1).astype(jnp.float32)

    s = s_input.astype(compute_dtype)
    k = k_input.astype(compute_dtype)

    # Batch tile: multiple of 8 (sublane), clamped to the (padded) batch size.
    tb = _round_up(min(block_batch, _round_up(batch, 8)), 8)
    grid = (pl.cdiv(batch, tb),)

    resident = lambda shape: pl.BlockSpec(shape, lambda i: (0, 0))

    return pl.pallas_call(
        _ensemble_kernel,
        out_shape=jax.ShapeDtypeStruct((batch, OUT_FEATURES), jnp.float32),
        grid=grid,
        in_specs=[
            pl.BlockSpec((tb, s_dim), lambda i: (i, 0)),        # s tile, streamed
            pl.BlockSpec((tb, k_dim), lambda i: (i, 0)),        # k tile, streamed
            resident((s_dim, HIDDEN)),                          # W1[:s_dim]
            resident((k_dim, HIDDEN)),                          # W1[s_dim:]
            resident((1, HIDDEN)),                              # b1
            resident((HIDDEN, 1)),                              # dw = w2[:,1]-w2[:,0]
            resident((1, 1)),                                   # db = b2[1]-b2[0]
        ],
        out_specs=pl.BlockSpec((tb, OUT_FEATURES), lambda i: (i, 0)),
        compiler_params=pltpu.CompilerParams(
            dimension_semantics=("parallel",),                  # megacore split on v7x
        ),
    )(s, k, w1_s, w1_k, b1_r, dw, db)


def init_params(key):
    """nn.Linear-style init (uniform +/- 1/sqrt(fan_in)); weights stored (in, out)."""
    k1, k2, k3, k4 = jax.random.split(key, 4)
    bound1 = 1.0 / jnp.sqrt(jnp.float32(IN_FEATURES))
    bound2 = 1.0 / jnp.sqrt(jnp.float32(HIDDEN))
    w1 = jax.random.uniform(k1, (IN_FEATURES, HIDDEN), jnp.float32, -bound1, bound1)
    b1 = jax.random.uniform(k2, (HIDDEN,), jnp.float32, -bound1, bound1)
    w2 = jax.random.uniform(k3, (HIDDEN, OUT_FEATURES), jnp.float32, -bound2, bound2)
    b2 = jax.random.uniform(k4, (OUT_FEATURES,), jnp.float32, -bound2, bound2)
    return w1, b1, w2, b2


def reference_forward(s, k, w1, b1, w2, b2):
    """Pure-JAX reference mirroring the kernel's numerics (bf16 first matmul)."""
    x = jnp.concatenate([s, k], axis=1).astype(jnp.bfloat16)
    h = jnp.dot(x, w1.astype(jnp.bfloat16), preferred_element_type=jnp.float32)
    h = jnp.maximum(h + b1.reshape(1, -1), 0.0)
    logits = jnp.dot(h, w2) + b2.reshape(1, -1)
    return jax.nn.softmax(logits, axis=1)


if __name__ == "__main__":
    key = jax.random.PRNGKey(0)
    kp, ks, kk = jax.random.split(key, 3)

    batch = 32
    s_dim = 48
    k_dim = 48  # s_dim + k_dim must equal 96 (nn.Linear(96, 32) input)

    s_input = jax.random.normal(ks, (batch, s_dim), jnp.float32)
    k_input = jax.random.normal(kk, (batch, k_dim), jnp.float32)
    w1, b1, w2, b2 = init_params(kp)

    # Small block_batch in the demo just to exercise the multi-step pipeline.
    out = b_ensemble_forward(s_input, k_input, w1, b1, w2, b2, block_batch=8)
    out = jax.block_until_ready(out)

    ref = reference_forward(s_input, k_input, w1, b1, w2, b2)

    assert out.shape == (batch, OUT_FEATURES)
    assert jnp.allclose(jnp.sum(out, axis=1), 1.0, atol=1e-5)
    assert jnp.allclose(out, ref, atol=1e-4), float(jnp.max(jnp.abs(out - ref)))

    print("KERNEL_OK")
</pallas_src>

<mosaic_0001>
module attributes {stable_mosaic.version = 11 : i64} {
  func.func @_ensemble_kernel(%arg0: i32, %arg1: memref<8x48xbf16, #tpu.memory_space<vmem>>, %arg2: memref<8x48xbf16, #tpu.memory_space<vmem>>, %arg3: memref<48x32xbf16, #tpu.memory_space<vmem>>, %arg4: memref<48x32xbf16, #tpu.memory_space<vmem>>, %arg5: memref<1x32xf32, #tpu.memory_space<vmem>>, %arg6: memref<32x1xf32, #tpu.memory_space<vmem>>, %arg7: memref<1x1xf32, #tpu.memory_space<vmem>>, %arg8: memref<8x2xf32, #tpu.memory_space<vmem>>) attributes {dimension_semantics = [#tpu.dimension_semantics<parallel>], iteration_bounds = array<i64: 4>, scalar_prefetch = 0 : i64, scratch_operands = 0 : i64, tpu.core_type = #tpu.core_type<tc>, window_params = [{transform_indices = @transform_0, window_bounds = array<i64: 8, 48>}, {transform_indices = @transform_1, window_bounds = array<i64: 8, 48>}, {pipeline_mode = #tpu.pipeline_mode<synchronous>, transform_indices = @transform_2, window_bounds = array<i64: 48, 32>}, {pipeline_mode = #tpu.pipeline_mode<synchronous>, transform_indices = @transform_3, window_bounds = array<i64: 48, 32>}, {pipeline_mode = #tpu.pipeline_mode<synchronous>, transform_indices = @transform_4, window_bounds = array<i64: 1, 32>}, {pipeline_mode = #tpu.pipeline_mode<synchronous>, transform_indices = @transform_5, window_bounds = array<i64: 32, 1>}, {pipeline_mode = #tpu.pipeline_mode<synchronous>, transform_indices = @transform_6, window_bounds = array<i64: 1, 1>}, {transform_indices = @transform_7, window_bounds = array<i64: 8, 2>}]} {
    %c0 = arith.constant 0 : index
    %c0_0 = arith.constant 0 : index
    %0 = vector.load %arg1[%c0, %c0_0] : memref<8x48xbf16, #tpu.memory_space<vmem>>, vector<8x48xbf16>
    %c0_1 = arith.constant 0 : index
    %c0_2 = arith.constant 0 : index
    %1 = vector.load %arg3[%c0_1, %c0_2] : memref<48x32xbf16, #tpu.memory_space<vmem>>, vector<48x32xbf16>
    %cst = arith.constant dense<0.000000e+00> : vector<8x32xf32>
    %2 = tpu.matmul %0, %1, %cst {dimension_numbers = #tpu.dot_dimension_numbers<[1], [0], [0], [1], [0, 0, 1, 1], [], []>} : vector<8x48xbf16>, vector<48x32xbf16>, vector<8x32xf32> -> vector<8x32xf32>
    %c0_3 = arith.constant 0 : index
    %c0_4 = arith.constant 0 : index
    %3 = vector.load %arg2[%c0_3, %c0_4] : memref<8x48xbf16, #tpu.memory_space<vmem>>, vector<8x48xbf16>
    %c0_5 = arith.constant 0 : index
    %c0_6 = arith.constant 0 : index
    %4 = vector.load %arg4[%c0_5, %c0_6] : memref<48x32xbf16, #tpu.memory_space<vmem>>, vector<48x32xbf16>
    %cst_7 = arith.constant dense<0.000000e+00> : vector<8x32xf32>
    %5 = tpu.matmul %3, %4, %cst_7 {dimension_numbers = #tpu.dot_dimension_numbers<[1], [0], [0], [1], [0, 0, 1, 1], [], []>} : vector<8x48xbf16>, vector<48x32xbf16>, vector<8x32xf32> -> vector<8x32xf32>
    %6 = arith.addf %2, %5 : vector<8x32xf32>
    %c0_8 = arith.constant 0 : index
    %c0_9 = arith.constant 0 : index
    %7 = vector.load %arg5[%c0_8, %c0_9] : memref<1x32xf32, #tpu.memory_space<vmem>>, vector<1x32xf32>
    %8 = vector.broadcast %7 : vector<1x32xf32> to vector<8x32xf32>
    %9 = arith.addf %6, %8 : vector<8x32xf32>
    %cst_10 = arith.constant 0.000000e+00 : f32
    %10 = vector.broadcast %cst_10 : f32 to vector<8x32xf32>
    %11 = arith.maximumf %9, %10 : vector<8x32xf32>
    %c0_11 = arith.constant 0 : index
    %c0_12 = arith.constant 0 : index
    %12 = vector.load %arg6[%c0_11, %c0_12] : memref<32x1xf32, #tpu.memory_space<vmem>>, vector<32x1xf32>
    %cst_13 = arith.constant dense<0.000000e+00> : vector<8x1xf32>
    %13 = tpu.matmul %11, %12, %cst_13 {dimension_numbers = #tpu.dot_dimension_numbers<[1], [0], [0], [1], [0, 0, 1, 1], [], []>} : vector<8x32xf32>, vector<32x1xf32>, vector<8x1xf32> -> vector<8x1xf32>
    %c0_14 = arith.constant 0 : index
    %c0_15 = arith.constant 0 : index
    %14 = vector.load %arg7[%c0_14, %c0_15] : memref<1x1xf32, #tpu.memory_space<vmem>>, vector<1x1xf32>
    %15 = vector.broadcast %14 : vector<1x1xf32> to vector<8x1xf32>
    %16 = arith.addf %13, %15 : vector<8x1xf32>
    %cst_16 = arith.constant 0.000000e+00 : f32
    %17 = vector.broadcast %cst_16 : f32 to vector<8x1xf32>
    %18 = arith.subf %17, %16 : vector<8x1xf32>
    %19 = math.exp %18 : vector<8x1xf32>
    %cst_17 = arith.constant 1.000000e+00 : f32
    %20 = vector.broadcast %cst_17 : f32 to vector<8x1xf32>
    %21 = arith.addf %20, %19 : vector<8x1xf32>
    %cst_18 = arith.constant 1.000000e+00 : f32
    %22 = vector.broadcast %cst_18 : f32 to vector<8x1xf32>
    %23 = arith.divf %22, %21 : vector<8x1xf32>
    %cst_19 = arith.constant 1.000000e+00 : f32
    %24 = vector.broadcast %cst_19 : f32 to vector<8x1xf32>
    %25 = arith.subf %24, %23 : vector<8x1xf32>
    %26 = tpu.iota {dimensions = array<i32: 1>} : vector<8x2xi32>
    %c1_i32 = arith.constant 1 : i32
    %27 = vector.broadcast %c1_i32 : i32 to vector<8x2xi32>
    %28 = arith.cmpi eq, %26, %27 : vector<8x2xi32>
    %29 = vector.shape_cast %23 : vector<8x1xf32> to vector<8x1xf32>
    %30 = vector.broadcast %29 : vector<8x1xf32> to vector<8x2xf32>
    %31 = vector.shape_cast %25 : vector<8x1xf32> to vector<8x1xf32>
    %32 = vector.broadcast %31 : vector<8x1xf32> to vector<8x2xf32>
    %33 = arith.select %28, %30, %32 : vector<8x2xi1>, vector<8x2xf32>
    %c0_20 = arith.constant 0 : index
    %c0_21 = arith.constant 0 : index
    %34 = vector.load %arg8[%c0_20, %c0_21] : memref<8x2xf32, #tpu.memory_space<vmem>>, vector<8x2xf32>
    tpu.vector_store %arg8[%c0_20, %c0_21], %33 {strides = array<i32>} : memref<8x2xf32, #tpu.memory_space<vmem>>, vector<8x2xf32>,
    return
  }
  func.func @transform_0(%arg0: i32) -> (i32, i32) {
    %c0_i32 = arith.constant 0 : i32
    %c0_i32_0 = arith.constant 0 : i32
    return %arg0, %c0_i32 : i32, i32
  }
  func.func @transform_1(%arg0: i32) -> (i32, i32) {
    %c0_i32 = arith.constant 0 : i32
    %c0_i32_0 = arith.constant 0 : i32
    return %arg0, %c0_i32 : i32, i32
  }
  func.func @transform_2(%arg0: i32) -> (i32, i32) {
    %c0_i32 = arith.constant 0 : i32
    %c0_i32_0 = arith.constant 0 : i32
    %c0_i32_1 = arith.constant 0 : i32
    return %c0_i32, %c0_i32_0 : i32, i32
  }
  func.func @transform_3(%arg0: i32) -> (i32, i32) {
    %c0_i32 = arith.constant 0 : i32
    %c0_i32_0 = arith.constant 0 : i32
    %c0_i32_1 = arith.constant 0 : i32
    return %c0_i32, %c0_i32_0 : i32, i32
  }
  func.func @transform_4(%arg0: i32) -> (i32, i32) {
    %c0_i32 = arith.constant 0 : i32
    %c0_i32_0 = arith.constant 0 : i32
    %c0_i32_1 = arith.constant 0 : i32
    return %c0_i32, %c0_i32_0 : i32, i32
  }
  func.func @transform_5(%arg0: i32) -> (i32, i32) {
    %c0_i32 = arith.constant 0 : i32
    %c0_i32_0 = arith.constant 0 : i32
    %c0_i32_1 = arith.constant 0 : i32
    return %c0_i32, %c0_i32_0 : i32, i32
  }
  func.func @transform_6(%arg0: i32) -> (i32, i32) {
    %c0_i32 = arith.constant 0 : i32
    %c0_i32_0 = arith.constant 0 : i32
    %c0_i32_1 = arith.constant 0 : i32
    return %c0_i32, %c0_i32_0 : i32, i32
  }
  func.func @transform_7(%arg0: i32) -> (i32, i32) {
    %c0_i32 = arith.constant 0 : i32
    %c0_i32_0 = arith.constant 0 : i32
    return %arg0, %c0_i32 : i32, i32
  }
}

</mosaic_0001>

<llo_original>
// kernel: b_ensemble_forward.1
$region0: #{b_ensemble_forward.1}
  #allocation0 [shape = 'u32[]', space=smem, size = 0x4, offset = 0x4, fixed_abs, tag = 'smem constant byte address 0x4 - core index']
  #allocation1 [shape = 'u32[144,128]{1,0:T(1,128)}', space=vmem, size = 0x12000, scoped, tag = 'internal scratch']
  #allocation2 [shape = 'f32[1,1]{1,0:T(1,128)S(1)}', space=vmem, size = 0x200, scoped, tag = 'scoped memory for b_ensemble_forward.1']
  %s0 = inlined_call_operand.vmem [shape: bf16[32,48], index: 0, kind: input, shape index: {}]
  %s1 = inlined_call_operand.vmem [shape: bf16[32,48], index: 1, kind: input, shape index: {}]
  %s2 = inlined_call_operand.vmem [shape: bf16[48,32], index: 2, kind: input, shape index: {}]
  %s3 = inlined_call_operand.vmem [shape: bf16[48,32], index: 3, kind: input, shape index: {}]
  %s4 = inlined_call_operand.vmem [shape: f32[1,32], index: 4, kind: input, shape index: {}]
  %s5 = inlined_call_operand.vmem [shape: f32[32,1], index: 5, kind: input, shape index: {}]
  %s6 = inlined_call_operand.<no memory space> [shape: f32[1,1], index: 6, kind: input, shape index: {}]
  %s7 = inlined_call_operand.vmem [shape: f32[32,2], index: 7, kind: output, shape index: {}]
  %s8 = sld [smem:[#allocation0]]
  $region61: #{b_ensemble_forward.1} parent=0
    _
  %s10 = ssub.s32 1, %s8
  %s11 = scalar_select 0, %s10, %s8
  %v12 = vstv %s6
  %13 = vst [vmem:[#allocation2] sm:$0x1] %v12
  loop: start=0, step=1, limit=6
  $region2: #{b_ensemble_forward.1} parent=0 // loop_pre_header
    _
  $region3: #{b_ensemble_forward.1} parent=0 // loop_header
    %s15 = sphi 0, %s19
    %p16 = scmp.ge.s32.totalorder %s15, 6
    %s25 = sphi 0, %s27
    %s28 = sphi 0, %s25
    %s29 = sphi 0, %s28
    %s45 = sphi 0, %s29
    %s51 = sphi 0, %s53
    %s54 = sphi 0, %s51
    %s55 = sphi 0, %s54
    %s71 = sphi 0, %s55
    %s75 = sphi 0, %s75
    %s77 = sphi 0, %s75
    %s78 = sphi 0, %s77
    %s92 = sphi 0, %s78
    %s96 = sphi 0, %s96
    %s98 = sphi 0, %s96
    %s99 = sphi 0, %s98
    %s113 = sphi 0, %s99
    %s117 = sphi 0, %s117
    %s119 = sphi 0, %s117
    %s120 = sphi 0, %s119
    %s134 = sphi 0, %s120
    %s138 = sphi 0, %s138
    %s140 = sphi 0, %s138
    %s141 = sphi 0, %s140
    %s155 = sphi 0, %s141
    %s159 = sphi 0, %s159
    %s161 = sphi 0, %s159
    %s162 = sphi 0, %s161
    %s176 = sphi 0, %s162
    %s182 = sphi 0, %s184
    %s185 = sphi 0, %s182
    %s186 = sphi 0, %s185
    %s202 = sphi 0, %s186
  $region4: #{b_ensemble_forward.1} parent=0 // loop_header_branch
    %18 = sbr.rel (%p16) target = $region8
  $region5: #{b_ensemble_forward.1} parent=0 // loop_body
    %s20 = ssub.s32 %s15, 1
    %s21 = ssub.s32 %s15, 2
    %s22 = sadd.s32 %s15, 1
    %s23 = ssub.s32 %s15, %s22
    %p24 = scmp.eq.s32.totalorder %s23, 0
    %s26 = sadd.s32 %s25, 1
    %s27 = scalar_select %p24, %s25, %s26
    %p30 = pneg %p24
    %p31 = scmp.eq.s32.totalorder %s15, 3
    %p32 = por %p30, %p31
    %p33 = scmp.ne.s32.totalorder %s25, %s28
    %p34 = scmp.eq.s32.totalorder %s15, 0
    %p35 = por %p33, %p34
    %p36 = scmp.ne.s32.totalorder %s25, %s28
    %p37 = scmp.eq.s32.totalorder %s20, 3
    %p38 = por %p36, %p37
    %p39 = scmp.ne.s32.totalorder %s28, %s29
    %p40 = scmp.eq.s32.totalorder %s20, 0
    %p41 = por %p39, %p40
    %p42 = scmp.ne.s32.totalorder %s28, %s29
    %p43 = scmp.eq.s32.totalorder %s21, 3
    %p44 = por %p42, %p43
    %p46 = scmp.ne.s32.totalorder %s29, %s45
    %p47 = scmp.eq.s32.totalorder %s21, 0
    %p48 = por %p46, %p47
    %s49 = ssub.s32 %s15, %s22
    %p50 = scmp.eq.s32.totalorder %s49, 0
    %s52 = sadd.s32 %s51, 1
    %s53 = scalar_select %p50, %s51, %s52
    %p56 = pneg %p50
    %p57 = scmp.eq.s32.totalorder %s15, 3
    %p58 = por %p56, %p57
    %p59 = scmp.ne.s32.totalorder %s51, %s54
    %p60 = scmp.eq.s32.totalorder %s15, 0
    %p61 = por %p59, %p60
    %p62 = scmp.ne.s32.totalorder %s51, %s54
    %p63 = scmp.eq.s32.totalorder %s20, 3
    %p64 = por %p62, %p63
    %p65 = scmp.ne.s32.totalorder %s54, %s55
    %p66 = scmp.eq.s32.totalorder %s20, 0
    %p67 = por %p65, %p66
    %p68 = scmp.ne.s32.totalorder %s54, %s55
    %p69 = scmp.eq.s32.totalorder %s21, 3
    %p70 = por %p68, %p69
    %p72 = scmp.ne.s32.totalorder %s55, %s71
    %p73 = scmp.eq.s32.totalorder %s21, 0
    %p74 = por %p72, %p73
    %s76 = sadd.s32 %s75, 1
    %p79 = scmp.eq.s32.totalorder %s15, 3
    %p80 = scmp.ne.s32.totalorder %s75, %s77
    %p81 = scmp.eq.s32.totalorder %s15, 0
    %p82 = por %p80, %p81
    %p83 = scmp.ne.s32.totalorder %s75, %s77
    %p84 = scmp.eq.s32.totalorder %s20, 3
    %p85 = por %p83, %p84
    %p86 = scmp.ne.s32.totalorder %s77, %s78
    %p87 = scmp.eq.s32.totalorder %s20, 0
    %p88 = por %p86, %p87
    %p89 = scmp.ne.s32.totalorder %s77, %s78
    %p90 = scmp.eq.s32.totalorder %s21, 3
    %p91 = por %p89, %p90
    %p93 = scmp.ne.s32.totalorder %s78, %s92
    %p94 = scmp.eq.s32.totalorder %s21, 0
    %p95 = por %p93, %p94
    %s97 = sadd.s32 %s96, 1
    %p100 = scmp.eq.s32.totalorder %s15, 3
    %p101 = scmp.ne.s32.totalorder %s96, %s98
    %p102 = scmp.eq.s32.totalorder %s15, 0
    %p103 = por %p101, %p102
    %p104 = scmp.ne.s32.totalorder %s96, %s98
    %p105 = scmp.eq.s32.totalorder %s20, 3
    %p106 = por %p104, %p105
    %p107 = scmp.ne.s32.totalorder %s98, %s99
    %p108 = scmp.eq.s32.totalorder %s20, 0
    %p109 = por %p107, %p108
    %p110 = scmp.ne.s32.totalorder %s98, %s99
    %p111 = scmp.eq.s32.totalorder %s21, 3
    %p112 = por %p110, %p111
    %p114 = scmp.ne.s32.totalorder %s99, %s113
    %p115 = scmp.eq.s32.totalorder %s21, 0
    %p116 = por %p114, %p115
    %s118 = sadd.s32 %s117, 1
    %p121 = scmp.eq.s32.totalorder %s15, 3
    %p122 = scmp.ne.s32.totalorder %s117, %s119
    %p123 = scmp.eq.s32.totalorder %s15, 0
    %p124 = por %p122, %p123
    %p125 = scmp.ne.s32.totalorder %s117, %s119
    %p126 = scmp.eq.s32.totalorder %s20, 3
    %p127 = por %p125, %p126
    %p128 = scmp.ne.s32.totalorder %s119, %s120
    %p129 = scmp.eq.s32.totalorder %s20, 0
    %p130 = por %p128, %p129
    %p131 = scmp.ne.s32.totalorder %s119, %s120
    %p132 = scmp.eq.s32.totalorder %s21, 3
    %p133 = por %p131, %p132
    %p135 = scmp.ne.s32.totalorder %s120, %s134
    %p136 = scmp.eq.s32.totalorder %s21, 0
    %p137 = por %p135, %p136
    %s139 = sadd.s32 %s138, 1
    %p142 = scmp.eq.s32.totalorder %s15, 3
    %p143 = scmp.ne.s32.totalorder %s138, %s140
    %p144 = scmp.eq.s32.totalorder %s15, 0
    %p145 = por %p143, %p144
    %p146 = scmp.ne.s32.totalorder %s138, %s140
    %p147 = scmp.eq.s32.totalorder %s20, 3
    %p148 = por %p146, %p147
    %p149 = scmp.ne.s32.totalorder %s140, %s141
    %p150 = scmp.eq.s32.totalorder %s20, 0
    %p151 = por %p149, %p150
    %p152 = scmp.ne.s32.totalorder %s140, %s141
    %p153 = scmp.eq.s32.totalorder %s21, 3
    %p154 = por %p152, %p153
    %p156 = scmp.ne.s32.totalorder %s141, %s155
    %p157 = scmp.eq.s32.totalorder %s21, 0
    %p158 = por %p156, %p157
    %s160 = sadd.s32 %s159, 1
    %p163 = scmp.eq.s32.totalorder %s15, 3
    %p164 = scmp.ne.s32.totalorder %s159, %s161
    %p165 = scmp.eq.s32.totalorder %s15, 0
    %p166 = por %p164, %p165
    %p167 = scmp.ne.s32.totalorder %s159, %s161
    %p168 = scmp.eq.s32.totalorder %s20, 3
    %p169 = por %p167, %p168
    %p170 = scmp.ne.s32.totalorder %s161, %s162
    %p171 = scmp.eq.s32.totalorder %s20, 0
    %p172 = por %p170, %p171
    %p173 = scmp.ne.s32.totalorder %s161, %s162
    %p174 = scmp.eq.s32.totalorder %s21, 3
    %p175 = por %p173, %p174
    %p177 = scmp.ne.s32.totalorder %s162, %s176
    %p178 = scmp.eq.s32.totalorder %s21, 0
    %p179 = por %p177, %p178
    %s180 = ssub.s32 %s15, %s22
    %p181 = scmp.eq.s32.totalorder %s180, 0
    %s183 = sadd.s32 %s182, 1
    %s184 = scalar_select %p181, %s182, %s183
    %p187 = pneg %p181
    %p188 = scmp.eq.s32.totalorder %s15, 3
    %p189 = por %p187, %p188
    %p190 = scmp.ne.s32.totalorder %s182, %s185
    %p191 = scmp.eq.s32.totalorder %s15, 0
    %p192 = por %p190, %p191
    %p193 = scmp.ne.s32.totalorder %s182, %s185
    %p194 = scmp.eq.s32.totalorder %s20, 3
    %p195 = por %p193, %p194
    %p196 = scmp.ne.s32.totalorder %s185, %s186
    %p197 = scmp.eq.s32.totalorder %s20, 0
    %p198 = por %p196, %p197
    %p199 = scmp.ne.s32.totalorder %s185, %s186
    %p200 = scmp.eq.s32.totalorder %s21, 3
    %p201 = por %p199, %p200
    %p203 = scmp.ne.s32.totalorder %s186, %s202
    %p204 = scmp.eq.s32.totalorder %s21, 0
    %p205 = por %p203, %p204
    %p206 = scmp.le.s32.totalorder 1, %s15
    %p207 = scmp.lt.s32.totalorder %s15, 5
    %p208 = pnand %p206, %p207
    %p209 = pneg %p208
    // Predicated region
    $region9: #{b_ensemble_forward.1} parent=5 // pred_check
      _
    $region10: #{b_ensemble_forward.1} parent=5 // pred_check_branch
      %211 = sbr.rel (%p208) target = $region12
    $region11: #{b_ensemble_forward.1} parent=5 // pred_region
      %s212 = ssub.s32 %s15, 1
      // Predicated region
      $region13: #{b_ensemble_forward.1} parent=11 // pred_check
        %p213 = pneg %p88
      $region14: #{b_ensemble_forward.1} parent=11 // pred_check_branch
        %215 = sbr.rel (%p213) target = $region16
      $region15: #{b_ensemble_forward.1} parent=11 // pred_region
        _
      $region16: #{b_ensemble_forward.1} parent=11 // pred_fallthru
        _
      // Predicated region
      $region17: #{b_ensemble_forward.1} parent=11 // pred_check
        %p216 = pneg %p109
      $region18: #{b_ensemble_forward.1} parent=11 // pred_check_branch
        %218 = sbr.rel (%p216) target = $region20
      $region19: #{b_ensemble_forward.1} parent=11 // pred_region
        _
      $region20: #{b_ensemble_forward.1} parent=11 // pred_fallthru
        _
      // Predicated region
      $region21: #{b_ensemble_forward.1} parent=11 // pred_check
        %p219 = pneg %p130
      $region22: #{b_ensemble_forward.1} parent=11 // pred_check_branch
        %221 = sbr.rel (%p219) target = $region24
      $region23: #{b_ensemble_forward.1} parent=11 // pred_region
        _
      $region24: #{b_ensemble_forward.1} parent=11 // pred_fallthru
        _
      // Predicated region
      $region25: #{b_ensemble_forward.1} parent=11 // pred_check
        %p222 = pneg %p151
      $region26: #{b_ensemble_forward.1} parent=11 // pred_check_branch
        %224 = sbr.rel (%p222) target = $region28
      $region27: #{b_ensemble_forward.1} parent=11 // pred_region
        _
      $region28: #{b_ensemble_forward.1} parent=11 // pred_fallthru
        _
      // Predicated region
      $region29: #{b_ensemble_forward.1} parent=11 // pred_check
        %p225 = pneg %p172
      $region30: #{b_ensemble_forward.1} parent=11 // pred_check_branch
        %227 = sbr.rel (%p225) target = $region32
      $region31: #{b_ensemble_forward.1} parent=11 // pred_region
        _
      $region32: #{b_ensemble_forward.1} parent=11 // pred_fallthru
        _
    $region12: #{b_ensemble_forward.1} parent=5 // pred_fallthru
      _
    %p228 = scmp.lt.s32.totalorder %s15, 4
    // Predicated region
    $region33: #{b_ensemble_forward.1} parent=5 // pred_check
      %p229 = pneg %p228
    $region34: #{b_ensemble_forward.1} parent=5 // pred_check_branch
      %231 = sbr.rel (%p229) target = $region36
    $region35: #{b_ensemble_forward.1} parent=5 // pred_region
      // Predicated region
      $region37: #{b_ensemble_forward.1} parent=35 // pred_check
        %p232 = pneg %p35
      $region38: #{b_ensemble_forward.1} parent=35 // pred_check_branch
        %234 = sbr.rel (%p232) target = $region40
      $region39: #{b_ensemble_forward.1} parent=35 // pred_region
        %p235 = scmp.lt.s32.totalorder %s15, 3
        %s236 = scalar_select %p235, %s15, 3
        %s237 = smul.addr %s236, 4
        %s238 = scalar_lea.vmem %s0, %s237
      $region40: #{b_ensemble_forward.1} parent=35 // pred_fallthru
        _
      // Predicated region
      $region41: #{b_ensemble_forward.1} parent=35 // pred_check
        %p239 = pneg %p61
      $region42: #{b_ensemble_forward.1} parent=35 // pred_check_branch
        %241 = sbr.rel (%p239) target = $region44
      $region43: #{b_ensemble_forward.1} parent=35 // pred_region
        %p242 = scmp.lt.s32.totalorder %s15, 3
        %s243 = scalar_select %p242, %s15, 3
        %s244 = smul.addr %s243, 4
        %s245 = scalar_lea.vmem %s1, %s244
      $region44: #{b_ensemble_forward.1} parent=35 // pred_fallthru
        _
    $region36: #{b_ensemble_forward.1} parent=5 // pred_fallthru
      _
    %p246 = scmp.le.s32.totalorder 1, %s15
    %p247 = scmp.lt.s32.totalorder %s15, 5
    %p248 = pnand %p246, %p247
    %p249 = pneg %p248
    // Predicated region
    $region45: #{b_ensemble_forward.1} parent=5 // pred_check
      _
    $region46: #{b_ensemble_forward.1} parent=5 // pred_check_branch
      %251 = sbr.rel (%p248) target = $region48
    $region47: #{b_ensemble_forward.1} parent=5 // pred_region
      %s252 = ssub.s32 %s15, 1
      %p253 = scmp.lt.s32.totalorder %s20, 3
      %s254 = scalar_select %p253, %s20, 3
      %s255 = smul.addr %s254, 4
      %s256 = scalar_lea.vmem %s0, %s255
      %p257 = pneg %p41
      %p258 = pneg %p38
      %p259 = scmp.lt.s32.totalorder %s20, 3
      %s260 = scalar_select %p259, %s20, 3
      %s261 = smul.addr %s260, 4
      %s262 = scalar_lea.vmem %s1, %s261
      %p263 = pneg %p67
      %p264 = pneg %p64
      %p265 = pneg %p88
      %p266 = pneg %p85
      %p267 = pneg %p109
      %p268 = pneg %p106
      %p269 = pneg %p130
      %p270 = pneg %p127
      %p271 = pneg %p151
      %p272 = pneg %p148
      %p273 = pneg %p172
      %p274 = pneg %p169
      %p275 = pneg %p198
      %p276 = pneg %p195
      %p277 = scmp.lt.s32.totalorder %s20, 3
      %s278 = scalar_select %p277, %s20, 3
      %s279 = smul.addr %s278, 8
      %s280 = scalar_lea.vmem %s7, %s279
      %p281 = scmp.lt.s32.totalorder %s20, 3
      %s282 = scalar_select %p281, %s20, 3
      %s283 = smul.addr %s282, 4
      %s284 = scalar_lea.vmem %s0, %s283
      %p285 = scmp.lt.s32.totalorder %s20, 3
      %s286 = scalar_select %p285, %s20, 3
      %s287 = smul.addr %s286, 4
      %s288 = scalar_lea.vmem %s1, %s287
      %p289 = scmp.lt.s32.totalorder %s20, 3
      %s290 = scalar_select %p289, %s20, 3
      %s291 = smul.addr %s290, 8
      %s292 = scalar_lea.vmem %s7, %s291
      %v294 = vld [vmem:[%s284] sm:$0xf]
      %v295 = vld [vmem:[%s2] sm:$0xf]
      %v296 = vld [vmem:[%s2 + $0x4] sm:$0xf]
      %v297 = vld [vmem:[%s2 + $0x8] sm:$0xf]
      %v298 = vld [vmem:[%s2 + $0xc] sm:$0xf]
      %v299 = vld [vmem:[%s2 + $0x10] sm:$0xf]
      %v300 = vld [vmem:[%s2 + $0x14] sm:$0xf]
      %v301 = vld [vmem:[%s288] sm:$0xf]
      %v302 = vld [vmem:[%s3] sm:$0xf]
      %v303 = vld [vmem:[%s3 + $0x4] sm:$0xf]
      %v304 = vld [vmem:[%s3 + $0x8] sm:$0xf]
      %v305 = vld [vmem:[%s3 + $0xc] sm:$0xf]
      %v306 = vld [vmem:[%s3 + $0x10] sm:$0xf]
      %v307 = vld [vmem:[%s3 + $0x14] sm:$0xf]
      %v314 = vunpack.c.l.b16 %v302
      %v315 = vunpack.c.l.b16 %v303
      %v316 = vunpack.c.l.b16 %v304
      %v317 = vunpack.c.l.b16 %v305
      %v318 = vunpack.c.l.b16 %v306
      %v319 = vunpack.c.l.b16 %v307
      %v320 = vpack.c.b16 %v315, %v314
      %v321 = vpack.c.b16 %v317, %v316
      %v322 = vpack.c.b16 %v319, %v318
      %vm326 = vcmask 392192
      %v328 = vsel %vm326, %v301, 0
      %330 = vmatprep.subr.bf16.mxu0 0
      %331 = vmatpush1.bf16.msra.mxu0 0
      %332 = vmatprep.subr.bf16.mxu0 0
      %333 = vmatpush1.bf16.msra.mxu0 0
      %334 = vmatprep.subr.bf16.mxu0 0
      %335 = vmatpush1.bf16.msra.mxu0 0
      %336 = vmatprep.subr.bf16.mxu0 0
      %337 = vmatpush1.bf16.msra.mxu0 0
      %338 = vmatprep.subr.bf16.mxu0 0
      %339 = vmatpush1.bf16.msra.mxu0 0
      %340 = vmatprep.subr.bf16.mxu0 0
      %341 = vmatpush1.bf16.msra.mxu0 %v322
      %342 = vmatprep.subr.bf16.mxu0 0
      %343 = vmatpush1.bf16.msra.mxu0 %v321
      %344 = vmatprep.subr.bf16.mxu0 0
      %345 = vmatpush1.bf16.msra.mxu0 %v320
      %346 = vmatprep.subr.bf16.mxu0 0
      %347 = vmatpush2.bf16.msra.mxu0 0
      %348 = vmatprep.subr.bf16.mxu0 0
      %349 = vmatpush2.bf16.msra.mxu0 0
      %350 = vmatprep.subr.bf16.mxu0 0
      %351 = vmatpush2.bf16.msra.mxu0 0
      %352 = vmatprep.subr.bf16.mxu0 0
      %353 = vmatpush2.bf16.msra.mxu0 0
      %354 = vmatprep.subr.bf16.mxu0 0
      %355 = vmatpush2.bf16.msra.mxu0 0
      %356 = vmatprep.subr.bf16.mxu0 0
      %357 = vmatpush2.bf16.msra.mxu0 0
      %358 = vmatprep.subr.bf16.mxu0 0
      %359 = vmatpush2.bf16.msra.mxu0 0
      %360 = vmatprep.subr.bf16.mxu0 0
      %361 = vmatpush2.bf16.msra.mxu0 0
      %362 = vmatprep.mubr.bf16.mxu0 0
      %363 = vmatmul.mubr.bf16.gmra.mxu0 %v328
      %v364 = vpop.f32.mrf.mxu0
      %v365 = vadd.f32 0.0, %v364
      %v366 = vpop.f32.mrf.mxu0
      %v367 = vpop.f32.mrf.mxu0
      %v368 = vpop.f32.mrf.mxu0
      %369 = vdwg.mxu0
      %v376 = vunpack.c.l.b16 %v295
      %v377 = vunpack.c.l.b16 %v296
      %v378 = vunpack.c.l.b16 %v297
      %v379 = vunpack.c.l.b16 %v298
      %v380 = vunpack.c.l.b16 %v299
      %v381 = vunpack.c.l.b16 %v300
      %v382 = vpack.c.b16 %v377, %v376
      %v383 = vpack.c.b16 %v379, %v378
      %v384 = vpack.c.b16 %v381, %v380
      %v389 = vsel %vm326, %v294, 0
      %391 = vmatprep.subr.bf16.mxu0 0
      %392 = vmatpush1.bf16.msra.mxu0 0
      %393 = vmatprep.subr.bf16.mxu0 0
      %394 = vmatpush1.bf16.msra.mxu0 0
      %395 = vmatprep.subr.bf16.mxu0 0
      %396 = vmatpush1.bf16.msra.mxu0 0
      %397 = vmatprep.subr.bf16.mxu0 0
      %398 = vmatpush1.bf16.msra.mxu0 0
      %399 = vmatprep.subr.bf16.mxu0 0
      %400 = vmatpush1.bf16.msra.mxu0 0
      %401 = vmatprep.subr.bf16.mxu0 0
      %402 = vmatpush1.bf16.msra.mxu0 %v384
      %403 = vmatprep.subr.bf16.mxu0 0
      %404 = vmatpush1.bf16.msra.mxu0 %v383
      %405 = vmatprep.subr.bf16.mxu0 0
      %406 = vmatpush1.bf16.msra.mxu0 %v382
      %407 = vmatprep.subr.bf16.mxu0 0
      %408 = vmatpush2.bf16.msra.mxu0 0
      %409 = vmatprep.subr.bf16.mxu0 0
      %410 = vmatpush2.bf16.msra.mxu0 0
      %411 = vmatprep.subr.bf16.mxu0 0
      %412 = vmatpush2.bf16.msra.mxu0 0
      %413 = vmatprep.subr.bf16.mxu0 0
      %414 = vmatpush2.bf16.msra.mxu0 0
      %415 = vmatprep.subr.bf16.mxu0 0
      %416 = vmatpush2.bf16.msra.mxu0 0
      %417 = vmatprep.subr.bf16.mxu0 0
      %418 = vmatpush2.bf16.msra.mxu0 0
      %419 = vmatprep.subr.bf16.mxu0 0
      %420 = vmatpush2.bf16.msra.mxu0 0
      %421 = vmatprep.subr.bf16.mxu0 0
      %422 = vmatpush2.bf16.msra.mxu0 0
      %423 = vmatprep.mubr.bf16.mxu0 0
      %424 = vmatmul.mubr.bf16.gmra.mxu0 %v389
      %v425 = vpop.f32.mrf.mxu0
      %v426 = vadd.f32 %v365, %v425
      %v427 = vpop.f32.mrf.mxu0
      %v428 = vpop.f32.mrf.mxu0
      %v429 = vpop.f32.mrf.mxu0
      %430 = vdwg.mxu0
      %v431 = vld [vmem:[%s4] sm:$0x1]
      %v433 = vlaneseq
      %v434 = vshrl.u32 %v433, 7
      %v435 = vsub.s32 0, %v434
      %v436 = vrot.slane %v431, %v435
      %v438 = vadd.f32 %v426, %v436
      %v439 = vmax.f32 %v438, 0.0
      %v440 = vld [vmem:[%s5] sm:$0xff]
      %v441 = vld [vmem:[%s5 + $0x8] sm:$0xff]
      %v442 = vld [vmem:[%s5 + $0x10] sm:$0xff]
      %v443 = vld [vmem:[%s5 + $0x18] sm:$0xff]
      %v444 = vld [vmem:[#allocation2] sm:$0x1]
      %v446 = vlaneseq
      %v447 = vshrl.u32 %v446, 7
      %v448 = vsub.s32 0, %v447
      %v449 = vrot.slane %v444, %v448
      %vm451 = vcmask 261120
      %v453 = vsel %vm451, %v439, 0
      %455 = vmatprep.subr.mxu0 0.0
      %456 = vmatpush1.msra.mxu0 0.0
      %457 = vmatprep.subr.mxu0 0.0
      %458 = vmatpush1.msra.mxu0 0.0
      %459 = vmatprep.subr.mxu0 0.0
      %460 = vmatpush1.msra.mxu0 0.0
      %461 = vmatprep.subr.mxu0 0.0
      %462 = vmatpush1.msra.mxu0 0.0
      %463 = vmatprep.subr.mxu0 0.0
      %464 = vmatpush1.msra.mxu0 0.0
      %465 = vmatprep.subr.mxu0 0.0
      %466 = vmatpush1.msra.mxu0 0.0
      %467 = vmatprep.subr.mxu0 0.0
      %468 = vmatpush1.msra.mxu0 0.0
      %469 = vmatprep.subr.mxu0 0.0
      %470 = vmatpush1.msra.mxu0 0.0
      %471 = vmatprep.subr.mxu0 0.0
      %472 = vmatpush1.msra.mxu0 0.0
      %473 = vmatprep.subr.mxu0 0.0
      %474 = vmatpush1.msra.mxu0 0.0
      %475 = vmatprep.subr.mxu0 0.0
      %476 = vmatpush1.msra.mxu0 0.0
      %477 = vmatprep.subr.mxu0 0.0
      %478 = vmatpush1.msra.mxu0 0.0
      %479 = vmatprep.subr.mxu0 0.0
      %480 = vmatpush1.msra.mxu0 %v443
      %481 = vmatprep.subr.mxu0 0.0
      %482 = vmatpush1.msra.mxu0 %v442
      %483 = vmatprep.subr.mxu0 0.0
      %484 = vmatpush1.msra.mxu0 %v441
      %485 = vmatprep.subr.mxu0 0.0
      %486 = vmatpush1.msra.mxu0 %v440
      %487 = vmatprep.subr.mxu0 0.0
      %488 = vmatpush2.msra.mxu0 0.0
      %489 = vmatprep.subr.mxu0 0.0
      %490 = vmatpush2.msra.mxu0 0.0
      %491 = vmatprep.subr.mxu0 0.0
      %492 = vmatpush2.msra.mxu0 0.0
      %493 = vmatprep.subr.mxu0 0.0
      %494 = vmatpush2.msra.mxu0 0.0
      %495 = vmatprep.subr.mxu0 0.0
      %496 = vmatpush2.msra.mxu0 0.0
      %497 = vmatprep.subr.mxu0 0.0
      %498 = vmatpush2.msra.mxu0 0.0
      %499 = vmatprep.subr.mxu0 0.0
      %500 = vmatpush2.msra.mxu0 0.0
      %501 = vmatprep.subr.mxu0 0.0
      %502 = vmatpush2.msra.mxu0 0.0
      %503 = vmatprep.subr.mxu0 0.0
      %504 = vmatpush2.msra.mxu0 0.0
      %505 = vmatprep.subr.mxu0 0.0
      %506 = vmatpush2.msra.mxu0 0.0
      %507 = vmatprep.subr.mxu0 0.0
      %508 = vmatpush2.msra.mxu0 0.0
      %509 = vmatprep.subr.mxu0 0.0
      %510 = vmatpush2.msra.mxu0 0.0
      %511 = vmatprep.subr.mxu0 0.0
      %512 = vmatpush2.msra.mxu0 0.0
      %513 = vmatprep.subr.mxu0 0.0
      %514 = vmatpush2.msra.mxu0 0.0
      %515 = vmatprep.subr.mxu0 0.0
      %516 = vmatpush2.msra.mxu0 0.0
      %517 = vmatprep.subr.mxu0 0.0
      %518 = vmatpush2.msra.mxu0 0.0
      %519 = vmatprep.mubr.f32.mxu0 0.0
      %520 = vmatmul.mubr.f32.gmra.mxu0 %v453
      %v521 = vpop.f32.mrf.mxu0
      %v522 = vadd.f32 %v449, %v521
      %v523 = vpop.f32.mrf.mxu0
      %524 = vdwg.mxu0
      %v525 = vsub.f32 0.0, %v522
      %v526 = vmul.f32 %v525, 1.442695
      %v527 = vpow.pop %v526
      %v528 = vadd.f32 %v527, 1.0
      %v529 = vrcp.pop %v528
      %v530 = vmul.f32 1.0, %v529
      %v531 = vsub.f32 1.0, %v530
      %v532 = vlaneseq
      %v533 = vand.u32 %v532, 127
      %vm534 = vcmp.eq.s32.totalorder %v533, 1
      %536 = vset.pattern.permute.xlu0 0
      %537 = vperm.xlu0 %536, %v530
      %v538 = vpop.permute.xlu0 %537
      %541 = vset.pattern.permute.xlu0 0
      %542 = vperm.xlu0 %541, %v531
      %v543 = vpop.permute.xlu0 %542
      %v545 = vsel %vm534, %v538, %v543
      %vm546 = vcmask 15360
      %547 = vst.msk [vmem:[%s292] sm:$0xff] %vm546, %v545
      %p548 = scmp.lt.s32.totalorder %s20, 3
      %s549 = scalar_select %p548, %s20, 3
      %s550 = smul.addr %s549, 8
      %s551 = scalar_lea.vmem %s7, %s550
      // Predicated region
      $region49: #{b_ensemble_forward.1} parent=47 // pred_check
        %p552 = pneg %p195
      $region50: #{b_ensemble_forward.1} parent=47 // pred_check_branch
        %554 = sbr.rel (%p552) target = $region52
      $region51: #{b_ensemble_forward.1} parent=47 // pred_region
        _
      $region52: #{b_ensemble_forward.1} parent=47 // pred_fallthru
        _
    $region48: #{b_ensemble_forward.1} parent=5 // pred_fallthru
      _
    %p555 = scmp.le.s32.totalorder 2, %s15
    // Predicated region
    $region53: #{b_ensemble_forward.1} parent=5 // pred_check
      %p556 = pneg %p555
    $region54: #{b_ensemble_forward.1} parent=5 // pred_check_branch
      %558 = sbr.rel (%p556) target = $region56
    $region55: #{b_ensemble_forward.1} parent=5 // pred_region
      %s559 = ssub.s32 %s15, 2
      // Predicated region
      $region57: #{b_ensemble_forward.1} parent=55 // pred_check
        %p560 = pneg %p201
      $region58: #{b_ensemble_forward.1} parent=55 // pred_check_branch
        %562 = sbr.rel (%p560) target = $region60
      $region59: #{b_ensemble_forward.1} parent=55 // pred_region
        %p563 = scmp.lt.s32.totalorder %s21, 3
        %s564 = scalar_select %p563, %s21, 3
        %s565 = smul.addr %s564, 8
        %s566 = scalar_lea.vmem %s7, %s565
      $region60: #{b_ensemble_forward.1} parent=55 // pred_fallthru
        _
    $region56: #{b_ensemble_forward.1} parent=5 // pred_fallthru
      _
  $region6: #{b_ensemble_forward.1} parent=0 // loop_footer
    %s19 = sadd.s32 1, %s15
  $region7: #{b_ensemble_forward.1} parent=0 // loop_footer_branch
    %14 = sbr.rel target = $region3
  $region8: #{b_ensemble_forward.1} parent=0 // loop_exit
    _

</llo_original>
